<compile_context>
chip_gen: v7x
topology: tpu7x:2x2x1
jax: 0.10.0
libtpu: 0.0.40
codegen_flags: <defaults>
</compile_context>

<pallas_src>
import functools

import jax
import jax.numpy as jnp
from jax.experimental import pallas as pl
from jax.experimental.pallas import tpu as pltpu


DIMS = [13, 128, 64, 32, 16, 3]


def _mlp_kernel(x_ref,
                w1_ref, b1_ref, w2_ref, b2_ref, w3_ref, b3_ref,
                w4_ref, b4_ref, w5_ref, b5_ref,
                out_ref):
    # x_ref: (13, TB) bf16, batch on the lane (fast) axis.
    # w*_ref: (out, in) bf16, resident in VMEM across all grid steps.
    # b*_ref: (out, 1) f32, resident.
    # out_ref: (3, TB) f32 -> unmasked lane-dense stores.
    b1 = b1_ref[...]
    b2 = b2_ref[...]
    b3 = b3_ref[...]
    b4 = b4_ref[...]
    b5 = b5_ref[...]

    h = x_ref[...]                                                   # (13, TB)

    # fc1..fc4: bf16 MXU matmul, f32 accumulate, bias+ReLU in f32.
    # Dropout layers are identity in eval/inference mode.
    h = jnp.dot(w1_ref[...], h, preferred_element_type=jnp.float32) + b1
    h = jnp.maximum(h, 0.0).astype(jnp.bfloat16)                     # (128, TB)
    h = jnp.dot(w2_ref[...], h, preferred_element_type=jnp.float32) + b2
    h = jnp.maximum(h, 0.0).astype(jnp.bfloat16)                     # (64, TB)
    h = jnp.dot(w3_ref[...], h, preferred_element_type=jnp.float32) + b3
    h = jnp.maximum(h, 0.0).astype(jnp.bfloat16)                     # (32, TB)
    h = jnp.dot(w4_ref[...], h, preferred_element_type=jnp.float32) + b4
    h = jnp.maximum(h, 0.0).astype(jnp.bfloat16)                     # (16, TB)

    # fc5: no activation, f32 output.
    out_ref[...] = jnp.dot(w5_ref[...], h,
                           preferred_element_type=jnp.float32) + b5  # (3, TB)


def _round_up(n, m):
    return (n + m - 1) // m * m


def _cdiv(a, b):
    return (a + b - 1) // b


def _resident_spec(shape):
    # Whole-array block with a constant index map -> buffer stays resident
    # in VMEM across all grid steps.
    return pl.BlockSpec(shape, lambda i: (0,) * len(shape))


@functools.lru_cache(maxsize=1)
def _vmem_capacity_bytes():
    try:
        info = pltpu.get_tpu_info()
        cap = int(getattr(info, "vmem_capacity_bytes", 0) or 0)
        if cap > 0:
            return cap
    except Exception:
        pass
    return 64 << 20   # conservative (v7x-class) fallback


def prepare_params(params):
    """One-time conversion of nn.Linear-style params (w=(out,in), b=(out,))
    into the kernel layout: bf16 weights, f32 (out, 1) biases."""
    prepped = []
    for w, b in params:
        prepped.append((jnp.asarray(w, jnp.bfloat16),
                        jnp.asarray(b, jnp.float32).reshape(-1, 1)))
    return tuple(prepped)


@functools.partial(jax.jit, static_argnames=("batch_tile", "vmem_cap"))
def _forward_impl(x, prepped, *, batch_tile, vmem_cap):
    B, F = x.shape
    assert F == DIMS[0]

    # ---- Tiling heuristic (all Python ints at trace time). ----
    pb0 = _round_up(B, 128)
    bt = max(128, _round_up(batch_tile, 128))
    n_steps = max(1, _cdiv(pb0, bt))
    if pb0 >= 256:
        # Keep >= 2 grid steps so "parallel" can use both v7x TensorCores
        # (measured no-op on single-TC v5e/v6e).
        n_steps = max(n_steps, 2)
    tb = _round_up(_cdiv(pb0, n_steps), 128)     # lane-width multiple
    padded_b = n_steps * tb

    # Live intermediates scale ~1-1.5 KiB per lane; give headroom, stay
    # well inside physical VMEM (128 MiB v5e/v6e, 64 MiB per-TC v7x).
    vmem_limit = int(max(32 << 20, min(vmem_cap - (16 << 20), tb * 3072)))

    # Fused (under jit) pad + transpose + bf16 cast: ONE HBM pass producing
    # the lane-dense (13, padded_b) kernel input.
    x_t = jnp.pad(x.astype(jnp.bfloat16).T, ((0, 0), (0, padded_b - B)))

    args = [x_t]
    in_specs = [pl.BlockSpec((DIMS[0], tb), lambda i: (0, i))]
    for (w, b) in prepped:
        args += [w, b]
        in_specs += [_resident_spec(w.shape), _resident_spec(b.shape)]

    out_t = pl.pallas_call(
        _mlp_kernel,
        out_shape=jax.ShapeDtypeStruct((DIMS[-1], padded_b), jnp.float32),
        grid=(n_steps,),
        in_specs=in_specs,
        out_specs=pl.BlockSpec((DIMS[-1], tb), lambda i: (0, i)),
        compiler_params=pltpu.CompilerParams(
            dimension_semantics=("parallel",),
            vmem_limit_bytes=vmem_limit),
    )(*args)

    # Padded columns carry ReLU(bias) garbage; slice them off, then the tiny
    # (3, B) -> (B, 3) transpose fuses with the slice under jit.
    return out_t[:, :B].T


def dog_sound_model_forward(x, prepped_params, *, batch_tile=None):
    """x: (B, 13) float32.  prepped_params: output of prepare_params().
    Returns (B, 3) float32 logits (eval mode: dropout = identity)."""
    cap = _vmem_capacity_bytes()
    if batch_tile is None:
        # 128 MiB VMEM (v5e/v6e) -> 32768-lane tiles; 64 MiB (v7x) -> 16384.
        batch_tile = 32768 if cap >= (100 << 20) else 16384
    return _forward_impl(x, prepped_params,
                         batch_tile=int(batch_tile), vmem_cap=int(cap))


def init_params(key):
    """Deterministic init matching nn.Linear: w=(out, in), b=(out,)."""
    params = []
    for i in range(5):
        key, kw, kb = jax.random.split(key, 3)
        fan_in, fan_out = DIMS[i], DIMS[i + 1]
        bound = 1.0 / jnp.sqrt(fan_in)
        w = jax.random.uniform(kw, (fan_out, fan_in), jnp.float32, -bound, bound)
        b = jax.random.uniform(kb, (fan_out,), jnp.float32, -bound, bound)
        params.append((w, b))
    return params


def reference_forward(x, params):
    """Pure-JAX reference mirroring the kernel numerics (bf16 matmul inputs,
    f32 accumulation, f32 bias/ReLU). Intentional numerics choice vs. the
    all-f32 PyTorch model; matches at 5e-3 tolerance."""
    h = x.astype(jnp.bfloat16)
    for i, (w, b) in enumerate(params):
        h = jnp.dot(h, w.astype(jnp.bfloat16).T,
                    preferred_element_type=jnp.float32) + b
        if i < 4:
            h = jnp.maximum(h, 0.0).astype(jnp.bfloat16)
    return h


if __name__ == "__main__":
    key = jax.random.PRNGKey(0)
    key, kx1, kx2 = jax.random.split(key, 3)
    params = init_params(key)
    prepped = prepare_params(params)

    # Small-batch check (single grid step).
    B = 8
    x = jax.random.normal(kx1, (B, 13), jnp.float32)
    out = jax.block_until_ready(dog_sound_model_forward(x, prepped))
    ref = reference_forward(x, params)
    assert out.shape == (B, 3)
    assert jnp.allclose(out, ref, atol=5e-3, rtol=5e-3)

    # Non-multiple-of-128 batch: exercises padding, the >=2-step grid clamp
    # (default tile) and a longer pipelined grid (batch_tile=128 -> grid=(3,)).
    B2 = 300
    x2 = jax.random.normal(kx2, (B2, 13), jnp.float32)
    out2 = jax.block_until_ready(dog_sound_model_forward(x2, prepped))
    out2_small = jax.block_until_ready(
        dog_sound_model_forward(x2, prepped, batch_tile=128))
    ref2 = reference_forward(x2, params)
    assert out2.shape == (B2, 3)
    assert jnp.allclose(out2, ref2, atol=5e-3, rtol=5e-3)
    assert jnp.allclose(out2_small, ref2, atol=5e-3, rtol=5e-3)

    print("KERNEL_OK")
</pallas_src>

<mosaic_0001>
module attributes {stable_mosaic.version = 11 : i64} {
  func.func @_mlp_kernel(%arg0: i32, %arg1: memref<13x128xbf16, #tpu.memory_space<vmem>>, %arg2: memref<128x13xbf16, #tpu.memory_space<vmem>>, %arg3: memref<128x1xf32, #tpu.memory_space<vmem>>, %arg4: memref<64x128xbf16, #tpu.memory_space<vmem>>, %arg5: memref<64x1xf32, #tpu.memory_space<vmem>>, %arg6: memref<32x64xbf16, #tpu.memory_space<vmem>>, %arg7: memref<32x1xf32, #tpu.memory_space<vmem>>, %arg8: memref<16x32xbf16, #tpu.memory_space<vmem>>, %arg9: memref<16x1xf32, #tpu.memory_space<vmem>>, %arg10: memref<3x16xbf16, #tpu.memory_space<vmem>>, %arg11: memref<3x1xf32, #tpu.memory_space<vmem>>, %arg12: memref<3x128xf32, #tpu.memory_space<vmem>>) attributes {dimension_semantics = [#tpu.dimension_semantics<parallel>], iteration_bounds = array<i64: 1>, scalar_prefetch = 0 : i64, scratch_operands = 0 : i64, tpu.core_type = #tpu.core_type<tc>, window_params = [{transform_indices = @transform_0, window_bounds = array<i64: 13, 128>}, {pipeline_mode = #tpu.pipeline_mode<synchronous>, transform_indices = @transform_1, window_bounds = array<i64: 128, 13>}, {pipeline_mode = #tpu.pipeline_mode<synchronous>, transform_indices = @transform_2, window_bounds = array<i64: 128, 1>}, {pipeline_mode = #tpu.pipeline_mode<synchronous>, transform_indices = @transform_3, window_bounds = array<i64: 64, 128>}, {pipeline_mode = #tpu.pipeline_mode<synchronous>, transform_indices = @transform_4, window_bounds = array<i64: 64, 1>}, {pipeline_mode = #tpu.pipeline_mode<synchronous>, transform_indices = @transform_5, window_bounds = array<i64: 32, 64>}, {pipeline_mode = #tpu.pipeline_mode<synchronous>, transform_indices = @transform_6, window_bounds = array<i64: 32, 1>}, {pipeline_mode = #tpu.pipeline_mode<synchronous>, transform_indices = @transform_7, window_bounds = array<i64: 16, 32>}, {pipeline_mode = #tpu.pipeline_mode<synchronous>, transform_indices = @transform_8, window_bounds = array<i64: 16, 1>}, {pipeline_mode = #tpu.pipeline_mode<synchronous>, transform_indices = @transform_9, window_bounds = array<i64: 3, 16>}, {pipeline_mode = #tpu.pipeline_mode<synchronous>, transform_indices = @transform_10, window_bounds = array<i64: 3, 1>}, {transform_indices = @transform_11, window_bounds = array<i64: 3, 128>}]} {
    %c0 = arith.constant 0 : index
    %c0_0 = arith.constant 0 : index
    %0 = vector.load %arg3[%c0, %c0_0] : memref<128x1xf32, #tpu.memory_space<vmem>>, vector<128x1xf32>
    %c0_1 = arith.constant 0 : index
    %c0_2 = arith.constant 0 : index
    %1 = vector.load %arg5[%c0_1, %c0_2] : memref<64x1xf32, #tpu.memory_space<vmem>>, vector<64x1xf32>
    %c0_3 = arith.constant 0 : index
    %c0_4 = arith.constant 0 : index
    %2 = vector.load %arg7[%c0_3, %c0_4] : memref<32x1xf32, #tpu.memory_space<vmem>>, vector<32x1xf32>
    %c0_5 = arith.constant 0 : index
    %c0_6 = arith.constant 0 : index
    %3 = vector.load %arg9[%c0_5, %c0_6] : memref<16x1xf32, #tpu.memory_space<vmem>>, vector<16x1xf32>
    %c0_7 = arith.constant 0 : index
    %c0_8 = arith.constant 0 : index
    %4 = vector.load %arg11[%c0_7, %c0_8] : memref<3x1xf32, #tpu.memory_space<vmem>>, vector<3x1xf32>
    %c0_9 = arith.constant 0 : index
    %c0_10 = arith.constant 0 : index
    %5 = vector.load %arg1[%c0_9, %c0_10] : memref<13x128xbf16, #tpu.memory_space<vmem>>, vector<13x128xbf16>
    %c0_11 = arith.constant 0 : index
    %c0_12 = arith.constant 0 : index
    %6 = vector.load %arg2[%c0_11, %c0_12] : memref<128x13xbf16, #tpu.memory_space<vmem>>, vector<128x13xbf16>
    %cst = arith.constant dense<0.000000e+00> : vector<128x128xf32>
    %7 = tpu.matmul %6, %5, %cst {dimension_numbers = #tpu.dot_dimension_numbers<[1], [0], [0], [1], [0, 0, 1, 1], [], []>} : vector<128x13xbf16>, vector<13x128xbf16>, vector<128x128xf32> -> vector<128x128xf32>
    %8 = vector.broadcast %0 : vector<128x1xf32> to vector<128x128xf32>
    %9 = arith.addf %7, %8 : vector<128x128xf32>
    %cst_13 = arith.constant 0.000000e+00 : f32
    %10 = vector.broadcast %cst_13 : f32 to vector<128x128xf32>
    %11 = arith.maximumf %9, %10 : vector<128x128xf32>
    %12 = arith.truncf %11 : vector<128x128xf32> to vector<128x128xbf16>
    %c0_14 = arith.constant 0 : index
    %c0_15 = arith.constant 0 : index
    %13 = vector.load %arg4[%c0_14, %c0_15] : memref<64x128xbf16, #tpu.memory_space<vmem>>, vector<64x128xbf16>
    %cst_16 = arith.constant dense<0.000000e+00> : vector<64x128xf32>
    %14 = tpu.matmul %13, %12, %cst_16 {dimension_numbers = #tpu.dot_dimension_numbers<[1], [0], [0], [1], [0, 0, 1, 1], [], []>} : vector<64x128xbf16>, vector<128x128xbf16>, vector<64x128xf32> -> vector<64x128xf32>
    %15 = vector.broadcast %1 : vector<64x1xf32> to vector<64x128xf32>
    %16 = arith.addf %14, %15 : vector<64x128xf32>
    %cst_17 = arith.constant 0.000000e+00 : f32
    %17 = vector.broadcast %cst_17 : f32 to vector<64x128xf32>
    %18 = arith.maximumf %16, %17 : vector<64x128xf32>
    %19 = arith.truncf %18 : vector<64x128xf32> to vector<64x128xbf16>
    %c0_18 = arith.constant 0 : index
    %c0_19 = arith.constant 0 : index
    %20 = vector.load %arg6[%c0_18, %c0_19] : memref<32x64xbf16, #tpu.memory_space<vmem>>, vector<32x64xbf16>
    %cst_20 = arith.constant dense<0.000000e+00> : vector<32x128xf32>
    %21 = tpu.matmul %20, %19, %cst_20 {dimension_numbers = #tpu.dot_dimension_numbers<[1], [0], [0], [1], [0, 0, 1, 1], [], []>} : vector<32x64xbf16>, vector<64x128xbf16>, vector<32x128xf32> -> vector<32x128xf32>
    %22 = vector.broadcast %2 : vector<32x1xf32> to vector<32x128xf32>
    %23 = arith.addf %21, %22 : vector<32x128xf32>
    %cst_21 = arith.constant 0.000000e+00 : f32
    %24 = vector.broadcast %cst_21 : f32 to vector<32x128xf32>
    %25 = arith.maximumf %23, %24 : vector<32x128xf32>
    %26 = arith.truncf %25 : vector<32x128xf32> to vector<32x128xbf16>
    %c0_22 = arith.constant 0 : index
    %c0_23 = arith.constant 0 : index
    %27 = vector.load %arg8[%c0_22, %c0_23] : memref<16x32xbf16, #tpu.memory_space<vmem>>, vector<16x32xbf16>
    %cst_24 = arith.constant dense<0.000000e+00> : vector<16x128xf32>
    %28 = tpu.matmul %27, %26, %cst_24 {dimension_numbers = #tpu.dot_dimension_numbers<[1], [0], [0], [1], [0, 0, 1, 1], [], []>} : vector<16x32xbf16>, vector<32x128xbf16>, vector<16x128xf32> -> vector<16x128xf32>
    %29 = vector.broadcast %3 : vector<16x1xf32> to vector<16x128xf32>
    %30 = arith.addf %28, %29 : vector<16x128xf32>
    %cst_25 = arith.constant 0.000000e+00 : f32
    %31 = vector.broadcast %cst_25 : f32 to vector<16x128xf32>
    %32 = arith.maximumf %30, %31 : vector<16x128xf32>
    %33 = arith.truncf %32 : vector<16x128xf32> to vector<16x128xbf16>
    %c0_26 = arith.constant 0 : index
    %c0_27 = arith.constant 0 : index
    %34 = vector.load %arg10[%c0_26, %c0_27] : memref<3x16xbf16, #tpu.memory_space<vmem>>, vector<3x16xbf16>
    %cst_28 = arith.constant dense<0.000000e+00> : vector<3x128xf32>
    %35 = tpu.matmul %34, %33, %cst_28 {dimension_numbers = #tpu.dot_dimension_numbers<[1], [0], [0], [1], [0, 0, 1, 1], [], []>} : vector<3x16xbf16>, vector<16x128xbf16>, vector<3x128xf32> -> vector<3x128xf32>
    %36 = vector.broadcast %4 : vector<3x1xf32> to vector<3x128xf32>
    %37 = arith.addf %35, %36 : vector<3x128xf32>
    %c0_29 = arith.constant 0 : index
    %c0_30 = arith.constant 0 : index
    %38 = vector.load %arg12[%c0_29, %c0_30] : memref<3x128xf32, #tpu.memory_space<vmem>>, vector<3x128xf32>
    tpu.vector_store %arg12[%c0_29, %c0_30], %37 {strides = array<i32>} : memref<3x128xf32, #tpu.memory_space<vmem>>, vector<3x128xf32>,
    return
  }
  func.func @transform_0(%arg0: i32) -> (i32, i32) {
    %c0_i32 = arith.constant 0 : i32
    %c0_i32_0 = arith.constant 0 : i32
    return %c0_i32, %arg0 : i32, i32
  }
  func.func @transform_1(%arg0: i32) -> (i32, i32) {
    %c0_i32 = arith.constant 0 : i32
    %c0_i32_0 = arith.constant 0 : i32
    %c0_i32_1 = arith.constant 0 : i32
    return %c0_i32, %c0_i32_0 : i32, i32
  }
  func.func @transform_2(%arg0: i32) -> (i32, i32) {
    %c0_i32 = arith.constant 0 : i32
    %c0_i32_0 = arith.constant 0 : i32
    %c0_i32_1 = arith.constant 0 : i32
    return %c0_i32, %c0_i32_0 : i32, i32
  }
  func.func @transform_3(%arg0: i32) -> (i32, i32) {
    %c0_i32 = arith.constant 0 : i32
    %c0_i32_0 = arith.constant 0 : i32
    %c0_i32_1 = arith.constant 0 : i32
    return %c0_i32, %c0_i32_0 : i32, i32
  }
  func.func @transform_4(%arg0: i32) -> (i32, i32) {
    %c0_i32 = arith.constant 0 : i32
    %c0_i32_0 = arith.constant 0 : i32
    %c0_i32_1 = arith.constant 0 : i32
    return %c0_i32, %c0_i32_0 : i32, i32
  }
  func.func @transform_5(%arg0: i32) -> (i32, i32) {
    %c0_i32 = arith.constant 0 : i32
    %c0_i32_0 = arith.constant 0 : i32
    %c0_i32_1 = arith.constant 0 : i32
    return %c0_i32, %c0_i32_0 : i32, i32
  }
  func.func @transform_6(%arg0: i32) -> (i32, i32) {
    %c0_i32 = arith.constant 0 : i32
    %c0_i32_0 = arith.constant 0 : i32
    %c0_i32_1 = arith.constant 0 : i32
    return %c0_i32, %c0_i32_0 : i32, i32
  }
  func.func @transform_7(%arg0: i32) -> (i32, i32) {
    %c0_i32 = arith.constant 0 : i32
    %c0_i32_0 = arith.constant 0 : i32
    %c0_i32_1 = arith.constant 0 : i32
    return %c0_i32, %c0_i32_0 : i32, i32
  }
  func.func @transform_8(%arg0: i32) -> (i32, i32) {
    %c0_i32 = arith.constant 0 : i32
    %c0_i32_0 = arith.constant 0 : i32
    %c0_i32_1 = arith.constant 0 : i32
    return %c0_i32, %c0_i32_0 : i32, i32
  }
  func.func @transform_9(%arg0: i32) -> (i32, i32) {
    %c0_i32 = arith.constant 0 : i32
    %c0_i32_0 = arith.constant 0 : i32
    %c0_i32_1 = arith.constant 0 : i32
    return %c0_i32, %c0_i32_0 : i32, i32
  }
  func.func @transform_10(%arg0: i32) -> (i32, i32) {
    %c0_i32 = arith.constant 0 : i32
    %c0_i32_0 = arith.constant 0 : i32
    %c0_i32_1 = arith.constant 0 : i32
    return %c0_i32, %c0_i32_0 : i32, i32
  }
  func.func @transform_11(%arg0: i32) -> (i32, i32) {
    %c0_i32 = arith.constant 0 : i32
    %c0_i32_0 = arith.constant 0 : i32
    return %c0_i32, %arg0 : i32, i32
  }
}

</mosaic_0001>

<llo_original>
// kernel: _forward_impl.1
$region0: #{_forward_impl.1}
  #allocation0 [shape = 'u32[]', space=smem, size = 0x4, offset = 0x4, fixed_abs, tag = 'smem constant byte address 0x4 - core index']
  #allocation1 [shape = 'u32[144,128]{1,0:T(1,128)}', space=vmem, size = 0x12000, scoped, tag = 'internal scratch']
  %s0 = inlined_call_operand.vmem [shape: bf16[13,128], index: 0, kind: input, shape index: {}]
  %s1 = inlined_call_operand.vmem [shape: bf16[128,13], index: 1, kind: input, shape index: {}]
  %s2 = inlined_call_operand.vmem [shape: f32[128,1], index: 2, kind: input, shape index: {}]
  %s3 = inlined_call_operand.vmem [shape: bf16[64,128], index: 3, kind: input, shape index: {}]
  %s4 = inlined_call_operand.vmem [shape: f32[64,1], index: 4, kind: input, shape index: {}]
  %s5 = inlined_call_operand.vmem [shape: bf16[32,64], index: 5, kind: input, shape index: {}]
  %s6 = inlined_call_operand.vmem [shape: f32[32,1], index: 6, kind: input, shape index: {}]
  %s7 = inlined_call_operand.vmem [shape: bf16[16,32], index: 7, kind: input, shape index: {}]
  %s8 = inlined_call_operand.vmem [shape: f32[16,1], index: 8, kind: input, shape index: {}]
  %s9 = inlined_call_operand.vmem [shape: bf16[3,16], index: 9, kind: input, shape index: {}]
  %s10 = inlined_call_operand.vmem [shape: f32[3,1], index: 10, kind: input, shape index: {}]
  %s11 = inlined_call_operand.vmem [shape: f32[3,128], index: 11, kind: output, shape index: {}]
  %s12 = sld [smem:[#allocation0]]
  $region54: #{_forward_impl.1} parent=0
    _
  %s14 = ssub.s32 1, %s12
  %s15 = scalar_select 0, %s14, %s12
  // Predicated region
  $region2: #{_forward_impl.1} parent=0 // pred_check
    _
  $region3: #{_forward_impl.1} parent=0 // pred_check_branch
    %17 = sbr.rel (0) target = $region5
  $region4: #{_forward_impl.1} parent=0 // pred_region
    _
  $region5: #{_forward_impl.1} parent=0 // pred_fallthru
    _
  // Predicated region
  $region6: #{_forward_impl.1} parent=0 // pred_check
    _
  $region7: #{_forward_impl.1} parent=0 // pred_check_branch
    %19 = sbr.rel (0) target = $region9
  $region8: #{_forward_impl.1} parent=0 // pred_region
    _
  $region9: #{_forward_impl.1} parent=0 // pred_fallthru
    _
  // Predicated region
  $region10: #{_forward_impl.1} parent=0 // pred_check
    _
  $region11: #{_forward_impl.1} parent=0 // pred_check_branch
    %21 = sbr.rel (0) target = $region13
  $region12: #{_forward_impl.1} parent=0 // pred_region
    _
  $region13: #{_forward_impl.1} parent=0 // pred_fallthru
    _
  // Predicated region
  $region14: #{_forward_impl.1} parent=0 // pred_check
    _
  $region15: #{_forward_impl.1} parent=0 // pred_check_branch
    %23 = sbr.rel (0) target = $region17
  $region16: #{_forward_impl.1} parent=0 // pred_region
    _
  $region17: #{_forward_impl.1} parent=0 // pred_fallthru
    _
  // Predicated region
  $region18: #{_forward_impl.1} parent=0 // pred_check
    _
  $region19: #{_forward_impl.1} parent=0 // pred_check_branch
    %25 = sbr.rel (0) target = $region21
  $region20: #{_forward_impl.1} parent=0 // pred_region
    _
  $region21: #{_forward_impl.1} parent=0 // pred_fallthru
    _
  // Predicated region
  $region22: #{_forward_impl.1} parent=0 // pred_check
    _
  $region23: #{_forward_impl.1} parent=0 // pred_check_branch
    %27 = sbr.rel (0) target = $region25
  $region24: #{_forward_impl.1} parent=0 // pred_region
    _
  $region25: #{_forward_impl.1} parent=0 // pred_fallthru
    _
  // Predicated region
  $region26: #{_forward_impl.1} parent=0 // pred_check
    _
  $region27: #{_forward_impl.1} parent=0 // pred_check_branch
    %29 = sbr.rel (0) target = $region29
  $region28: #{_forward_impl.1} parent=0 // pred_region
    _
  $region29: #{_forward_impl.1} parent=0 // pred_fallthru
    _
  // Predicated region
  $region30: #{_forward_impl.1} parent=0 // pred_check
    _
  $region31: #{_forward_impl.1} parent=0 // pred_check_branch
    %31 = sbr.rel (0) target = $region33
  $region32: #{_forward_impl.1} parent=0 // pred_region
    _
  $region33: #{_forward_impl.1} parent=0 // pred_fallthru
    _
  // Predicated region
  $region34: #{_forward_impl.1} parent=0 // pred_check
    _
  $region35: #{_forward_impl.1} parent=0 // pred_check_branch
    %33 = sbr.rel (0) target = $region37
  $region36: #{_forward_impl.1} parent=0 // pred_region
    _
  $region37: #{_forward_impl.1} parent=0 // pred_fallthru
    _
  // Predicated region
  $region38: #{_forward_impl.1} parent=0 // pred_check
    _
  $region39: #{_forward_impl.1} parent=0 // pred_check_branch
    %35 = sbr.rel (0) target = $region41
  $region40: #{_forward_impl.1} parent=0 // pred_region
    _
  $region41: #{_forward_impl.1} parent=0 // pred_fallthru
    _
  // Predicated region
  $region42: #{_forward_impl.1} parent=0 // pred_check
    _
  $region43: #{_forward_impl.1} parent=0 // pred_check_branch
    %37 = sbr.rel (0) target = $region45
  $region44: #{_forward_impl.1} parent=0 // pred_region
    _
  $region45: #{_forward_impl.1} parent=0 // pred_fallthru
    _
  %v39 = vld [vmem:[%s2] sm:$0xff]
  %v40 = vld [vmem:[%s2 + $0x8] sm:$0xff]
  %v41 = vld [vmem:[%s2 + $0x10] sm:$0xff]
  %v42 = vld [vmem:[%s2 + $0x18] sm:$0xff]
  %v43 = vld [vmem:[%s2 + $0x20] sm:$0xff]
  %v44 = vld [vmem:[%s2 + $0x28] sm:$0xff]
  %v45 = vld [vmem:[%s2 + $0x30] sm:$0xff]
  %v46 = vld [vmem:[%s2 + $0x38] sm:$0xff]
  %v47 = vld [vmem:[%s2 + $0x40] sm:$0xff]
  %v48 = vld [vmem:[%s2 + $0x48] sm:$0xff]
  %v49 = vld [vmem:[%s2 + $0x50] sm:$0xff]
  %v50 = vld [vmem:[%s2 + $0x58] sm:$0xff]
  %v51 = vld [vmem:[%s2 + $0x60] sm:$0xff]
  %v52 = vld [vmem:[%s2 + $0x68] sm:$0xff]
  %v53 = vld [vmem:[%s2 + $0x70] sm:$0xff]
  %v54 = vld [vmem:[%s2 + $0x78] sm:$0xff]
  %v55 = vld [vmem:[%s4] sm:$0xff]
  %v56 = vld [vmem:[%s4 + $0x8] sm:$0xff]
  %v57 = vld [vmem:[%s4 + $0x10] sm:$0xff]
  %v58 = vld [vmem:[%s4 + $0x18] sm:$0xff]
  %v59 = vld [vmem:[%s4 + $0x20] sm:$0xff]
  %v60 = vld [vmem:[%s4 + $0x28] sm:$0xff]
  %v61 = vld [vmem:[%s4 + $0x30] sm:$0xff]
  %v62 = vld [vmem:[%s4 + $0x38] sm:$0xff]
  %v63 = vld [vmem:[%s6] sm:$0xff]
  %v64 = vld [vmem:[%s6 + $0x8] sm:$0xff]
  %v65 = vld [vmem:[%s6 + $0x10] sm:$0xff]
  %v66 = vld [vmem:[%s6 + $0x18] sm:$0xff]
  %v67 = vld [vmem:[%s8] sm:$0xff]
  %v68 = vld [vmem:[%s8 + $0x8] sm:$0xff]
  %v69 = vld [vmem:[%s10] sm:$0x7]
  %v70 = vld [vmem:[%s0] sm:$0xf]
  %v71 = vld [vmem:[%s0 + $0x4] sm:$0x7]
  %v72 = vld [vmem:[%s1] sm:$0xf]
  %v73 = vld [vmem:[%s1 + $0x4] sm:$0xf]
  %v74 = vld [vmem:[%s1 + $0x8] sm:$0xf]
  %v75 = vld [vmem:[%s1 + $0xc] sm:$0xf]
  %v76 = vld [vmem:[%s1 + $0x10] sm:$0xf]
  %v77 = vld [vmem:[%s1 + $0x14] sm:$0xf]
  %v78 = vld [vmem:[%s1 + $0x18] sm:$0xf]
  %v79 = vld [vmem:[%s1 + $0x1c] sm:$0xf]
  %v80 = vld [vmem:[%s1 + $0x20] sm:$0xf]
  %v81 = vld [vmem:[%s1 + $0x24] sm:$0xf]
  %v82 = vld [vmem:[%s1 + $0x28] sm:$0xf]
  %v83 = vld [vmem:[%s1 + $0x2c] sm:$0xf]
  %v84 = vld [vmem:[%s1 + $0x30] sm:$0xf]
  %v85 = vld [vmem:[%s1 + $0x34] sm:$0xf]
  %v86 = vld [vmem:[%s1 + $0x38] sm:$0xf]
  %v87 = vld [vmem:[%s1 + $0x3c] sm:$0xf]
  %89 = vset.pattern.permute.xlu0 0
  %90 = vperm.xlu0 %89, %v39
  %v91 = vpop.permute.xlu0 %90
  %94 = vset.pattern.permute.xlu0 0
  %95 = vperm.xlu0 %94, %v40
  %v96 = vpop.permute.xlu0 %95
  %99 = vset.pattern.permute.xlu0 0
  %100 = vperm.xlu0 %99, %v41
  %v101 = vpop.permute.xlu0 %100
  %104 = vset.pattern.permute.xlu0 0
  %105 = vperm.xlu0 %104, %v42
  %v106 = vpop.permute.xlu0 %105
  %109 = vset.pattern.permute.xlu0 0
  %110 = vperm.xlu0 %109, %v43
  %v111 = vpop.permute.xlu0 %110
  %114 = vset.pattern.permute.xlu0 0
  %115 = vperm.xlu0 %114, %v44
  %v116 = vpop.permute.xlu0 %115
  %119 = vset.pattern.permute.xlu0 0
  %120 = vperm.xlu0 %119, %v45
  %v121 = vpop.permute.xlu0 %120
  %124 = vset.pattern.permute.xlu0 0
  %125 = vperm.xlu0 %124, %v46
  %v126 = vpop.permute.xlu0 %125
  %129 = vset.pattern.permute.xlu0 0
  %130 = vperm.xlu0 %129, %v47
  %v131 = vpop.permute.xlu0 %130
  %134 = vset.pattern.permute.xlu0 0
  %135 = vperm.xlu0 %134, %v48
  %v136 = vpop.permute.xlu0 %135
  %139 = vset.pattern.permute.xlu0 0
  %140 = vperm.xlu0 %139, %v49
  %v141 = vpop.permute.xlu0 %140
  %144 = vset.pattern.permute.xlu0 0
  %145 = vperm.xlu0 %144, %v50
  %v146 = vpop.permute.xlu0 %145
  %149 = vset.pattern.permute.xlu0 0
  %150 = vperm.xlu0 %149, %v51
  %v151 = vpop.permute.xlu0 %150
  %154 = vset.pattern.permute.xlu0 0
  %155 = vperm.xlu0 %154, %v52
  %v156 = vpop.permute.xlu0 %155
  %159 = vset.pattern.permute.xlu0 0
  %160 = vperm.xlu0 %159, %v53
  %v161 = vpop.permute.xlu0 %160
  %164 = vset.pattern.permute.xlu0 0
  %165 = vperm.xlu0 %164, %v54
  %v166 = vpop.permute.xlu0 %165
  %v184 = vunpack.c.l.b16 %v72
  %v185 = vunpack.c.l.b16 %v73
  %v186 = vunpack.c.l.b16 %v74
  %v187 = vunpack.c.l.b16 %v75
  %v188 = vunpack.c.l.b16 %v76
  %v189 = vunpack.c.l.b16 %v77
  %v190 = vunpack.c.l.b16 %v78
  %v191 = vunpack.c.l.b16 %v79
  %v192 = vunpack.c.l.b16 %v80
  %v193 = vunpack.c.l.b16 %v81
  %v194 = vunpack.c.l.b16 %v82
  %v195 = vunpack.c.l.b16 %v83
  %v196 = vunpack.c.l.b16 %v84
  %v197 = vunpack.c.l.b16 %v85
  %v198 = vunpack.c.l.b16 %v86
  %v199 = vunpack.c.l.b16 %v87
  %v200 = vpack.c.b16 %v185, %v184
  %v201 = vpack.c.b16 %v187, %v186
  %v202 = vpack.c.b16 %v189, %v188
  %v203 = vpack.c.b16 %v191, %v190
  %v204 = vpack.c.b16 %v193, %v192
  %v205 = vpack.c.b16 %v195, %v194
  %v206 = vpack.c.b16 %v197, %v196
  %v207 = vpack.c.b16 %v199, %v198
  %v210 = vunpack.c.l.b16 %v70
  %v211 = vunpack.c.l.b16 %v71
  %v212 = vpack.c.b16 %v211, %v210
  %vm213 = vcmask 105472
  %v215 = vsel %vm213, %v200, 0
  %v218 = vsel %vm213, %v201, 0
  %v221 = vsel %vm213, %v202, 0
  %v224 = vsel %vm213, %v203, 0
  %v227 = vsel %vm213, %v204, 0
  %v230 = vsel %vm213, %v205, 0
  %v233 = vsel %vm213, %v206, 0
  %v236 = vsel %vm213, %v207, 0
  %vm238 = vcmask 1045504
  %vm239 = vcmask 1046528
  %v240 = vsel %vm238, 4294967295, 65535
  %v241 = vsel %vm239, %v240, 0
  %v243 = vand.u32 %v212, %v241
  %245 = vmatprep.subr.bf16.mxu0 0
  %246 = vmatpush1.bf16.msra.mxu0 %v243
  %247 = vmatprep.subr.bf16.mxu0 0
  %248 = vmatpush1.bf16.msra.mxu0 0
  %249 = vmatprep.subr.bf16.mxu0 0
  %250 = vmatpush1.bf16.msra.mxu0 0
  %251 = vmatprep.subr.bf16.mxu0 0
  %252 = vmatpush1.bf16.msra.mxu0 0
  %253 = vmatprep.subr.bf16.mxu0 0
  %254 = vmatpush1.bf16.msra.mxu0 0
  %255 = vmatprep.subr.bf16.mxu0 0
  %256 = vmatpush1.bf16.msra.mxu0 0
  %257 = vmatprep.subr.bf16.mxu0 0
  %258 = vmatpush1.bf16.msra.mxu0 0
  %259 = vmatprep.subr.bf16.mxu0 0
  %260 = vmatpush1.bf16.msra.mxu0 0
  %261 = vmatprep.subr.bf16.mxu0 0
  %262 = vmatpush1.bf16.msra.mxu0 0
  %263 = vmatprep.subr.bf16.mxu0 0
  %264 = vmatpush1.bf16.msra.mxu0 0
  %265 = vmatprep.subr.bf16.mxu0 0
  %266 = vmatpush1.bf16.msra.mxu0 0
  %267 = vmatprep.subr.bf16.mxu0 0
  %268 = vmatpush1.bf16.msra.mxu0 0
  %269 = vmatprep.subr.bf16.mxu0 0
  %270 = vmatpush1.bf16.msra.mxu0 0
  %271 = vmatprep.subr.bf16.mxu0 0
  %272 = vmatpush1.bf16.msra.mxu0 0
  %273 = vmatprep.subr.bf16.mxu0 0
  %274 = vmatpush1.bf16.msra.mxu0 0
  %275 = vmatprep.subr.bf16.mxu0 0
  %276 = vmatpush1.bf16.msra.mxu0 0
  %277 = vmatprep.mubr.bf16.mxu0 0
  %278 = vmatmul.mubr.bf16.gmra.mrb[0].mxu0 %v215
  %v279 = vpop.f32.mrb[0].mxu0
  %v280 = vadd.f32 %v91, %v279
  %v281 = vpop.f32.mrb[0].mxu0
  %v282 = vpop.f32.mrb[0].mxu0
  %v283 = vadd.f32 %v96, %v282
  %v284 = vpop.f32.mrb[0].mxu0
  %285 = vmatprep.mubr.bf16.mxu0 0
  %286 = vmatmul.mubr.bf16.gmra.mrb[0].mxu0 %v218
  %v287 = vpop.f32.mrb[0].mxu0
  %v288 = vadd.f32 %v101, %v287
  %v289 = vpop.f32.mrb[0].mxu0
  %v290 = vpop.f32.mrb[0].mxu0
  %v291 = vadd.f32 %v106, %v290
  %v292 = vpop.f32.mrb[0].mxu0
  %293 = vmatprep.mubr.bf16.mxu0 0
  %294 = vmatmul.mubr.bf16.gmra.mrb[0].mxu0 %v221
  %v295 = vpop.f32.mrb[0].mxu0
  %v296 = vadd.f32 %v111, %v295
  %v297 = vpop.f32.mrb[0].mxu0
  %v298 = vpop.f32.mrb[0].mxu0
  %v299 = vadd.f32 %v116, %v298
  %v300 = vpop.f32.mrb[0].mxu0
  %301 = vmatprep.mubr.bf16.mxu0 0
  %302 = vmatmul.mubr.bf16.gmra.mrb[0].mxu0 %v224
  %v303 = vpop.f32.mrb[0].mxu0
  %v304 = vadd.f32 %v121, %v303
  %v305 = vpop.f32.mrb[0].mxu0
  %v306 = vpop.f32.mrb[0].mxu0
  %v307 = vadd.f32 %v126, %v306
  %v308 = vpop.f32.mrb[0].mxu0
  %309 = vmatprep.mubr.bf16.mxu0 0
  %310 = vmatmul.mubr.bf16.gmra.mrb[0].mxu0 %v227
  %v311 = vpop.f32.mrb[0].mxu0
  %v312 = vadd.f32 %v131, %v311
  %v313 = vpop.f32.mrb[0].mxu0
  %v314 = vpop.f32.mrb[0].mxu0
  %v315 = vadd.f32 %v136, %v314
  %v316 = vpop.f32.mrb[0].mxu0
  %317 = vmatprep.mubr.bf16.mxu0 0
  %318 = vmatmul.mubr.bf16.gmra.mrb[0].mxu0 %v230
  %v319 = vpop.f32.mrb[0].mxu0
  %v320 = vadd.f32 %v141, %v319
  %v321 = vpop.f32.mrb[0].mxu0
  %v322 = vpop.f32.mrb[0].mxu0
  %v323 = vadd.f32 %v146, %v322
  %v324 = vpop.f32.mrb[0].mxu0
  %325 = vmatprep.mubr.bf16.mxu0 0
  %326 = vmatmul.mubr.bf16.gmra.mrb[0].mxu0 %v233
  %v327 = vpop.f32.mrb[0].mxu0
  %v328 = vadd.f32 %v151, %v327
  %v329 = vpop.f32.mrb[0].mxu0
  %v330 = vpop.f32.mrb[0].mxu0
  %v331 = vadd.f32 %v156, %v330
  %v332 = vpop.f32.mrb[0].mxu0
  %333 = vmatprep.mubr.bf16.mxu0 0
  %334 = vmatmul.mubr.bf16.gmra.mrb[0].mxu0 %v236
  %v335 = vpop.f32.mrb[0].mxu0
  %v336 = vadd.f32 %v161, %v335
  %v337 = vpop.f32.mrb[0].mxu0
  %v338 = vpop.f32.mrb[0].mxu0
  %v339 = vadd.f32 %v166, %v338
  %v340 = vpop.f32.mrb[0].mxu0
  %341 = vdwg.mxu0
  %v342 = vmax.f32 %v280, 0.0
  %v343 = vmax.f32 %v283, 0.0
  %v344 = vmax.f32 %v288, 0.0
  %v345 = vmax.f32 %v291, 0.0
  %v346 = vmax.f32 %v296, 0.0
  %v347 = vmax.f32 %v299, 0.0
  %v348 = vmax.f32 %v304, 0.0
  %v349 = vmax.f32 %v307, 0.0
  %v350 = vmax.f32 %v312, 0.0
  %v351 = vmax.f32 %v315, 0.0
  %v352 = vmax.f32 %v320, 0.0
  %v353 = vmax.f32 %v323, 0.0
  %v354 = vmax.f32 %v328, 0.0
  %v355 = vmax.f32 %v331, 0.0
  %v356 = vmax.f32 %v336, 0.0
  %v357 = vmax.f32 %v339, 0.0
  %v358 = vpack.c.bf16 %v343, %v342
  %v359 = vpack.c.bf16 %v345, %v344
  %v360 = vpack.c.bf16 %v347, %v346
  %v361 = vpack.c.bf16 %v349, %v348
  %v362 = vpack.c.bf16 %v351, %v350
  %v363 = vpack.c.bf16 %v353, %v352
  %v364 = vpack.c.bf16 %v355, %v354
  %v365 = vpack.c.bf16 %v357, %v356
  %v366 = vld [vmem:[%s3] sm:$0xf]
  %v367 = vld [vmem:[%s3 + $0x4] sm:$0xf]
  %v368 = vld [vmem:[%s3 + $0x8] sm:$0xf]
  %v369 = vld [vmem:[%s3 + $0xc] sm:$0xf]
  %v370 = vld [vmem:[%s3 + $0x10] sm:$0xf]
  %v371 = vld [vmem:[%s3 + $0x14] sm:$0xf]
  %v372 = vld [vmem:[%s3 + $0x18] sm:$0xf]
  %v373 = vld [vmem:[%s3 + $0x1c] sm:$0xf]
  %375 = vset.pattern.permute.xlu0 0
  %376 = vperm.xlu0 %375, %v55
  %v377 = vpop.permute.xlu0 %376
  %380 = vset.pattern.permute.xlu0 0
  %381 = vperm.xlu0 %380, %v56
  %v382 = vpop.permute.xlu0 %381
  %385 = vset.pattern.permute.xlu0 0
  %386 = vperm.xlu0 %385, %v57
  %v387 = vpop.permute.xlu0 %386
  %390 = vset.pattern.permute.xlu0 0
  %391 = vperm.xlu0 %390, %v58
  %v392 = vpop.permute.xlu0 %391
  %395 = vset.pattern.permute.xlu0 0
  %396 = vperm.xlu0 %395, %v59
  %v397 = vpop.permute.xlu0 %396
  %400 = vset.pattern.permute.xlu0 0
  %401 = vperm.xlu0 %400, %v60
  %v402 = vpop.permute.xlu0 %401
  %405 = vset.pattern.permute.xlu0 0
  %406 = vperm.xlu0 %405, %v61
  %v407 = vpop.permute.xlu0 %406
  %410 = vset.pattern.permute.xlu0 0
  %411 = vperm.xlu0 %410, %v62
  %v412 = vpop.permute.xlu0 %411
  %v422 = vunpack.c.l.b16 %v366
  %v423 = vunpack.c.l.b16 %v367
  %v424 = vunpack.c.l.b16 %v368
  %v425 = vunpack.c.l.b16 %v369
  %v426 = vunpack.c.l.b16 %v370
  %v427 = vunpack.c.l.b16 %v371
  %v428 = vunpack.c.l.b16 %v372
  %v429 = vunpack.c.l.b16 %v373
  %v430 = vpack.c.b16 %v423, %v422
  %v431 = vpack.c.b16 %v425, %v424
  %v432 = vpack.c.b16 %v427, %v426
  %v433 = vpack.c.b16 %v429, %v428
  %438 = vmatprep.subr.bf16.mxu0 0
  %439 = vmatpush1.bf16.msra.mxu0 %v358
  %440 = vmatprep.subr.bf16.mxu0 0
  %441 = vmatpush1.bf16.msra.mxu0 %v359
  %442 = vmatprep.subr.bf16.mxu0 0
  %443 = vmatpush1.bf16.msra.mxu0 %v360
  %444 = vmatprep.subr.bf16.mxu0 0
  %445 = vmatpush1.bf16.msra.mxu0 %v361
  %446 = vmatprep.subr.bf16.mxu0 0
  %447 = vmatpush1.bf16.msra.mxu0 %v362
  %448 = vmatprep.subr.bf16.mxu0 0
  %449 = vmatpush1.bf16.msra.mxu0 %v363
  %450 = vmatprep.subr.bf16.mxu0 0
  %451 = vmatpush1.bf16.msra.mxu0 %v364
  %452 = vmatprep.subr.bf16.mxu0 0
  %453 = vmatpush1.bf16.msra.mxu0 %v365
  %454 = vmatprep.subr.bf16.mxu0 0
  %455 = vmatpush1.bf16.msra.mxu0 0
  %456 = vmatprep.subr.bf16.mxu0 0
  %457 = vmatpush1.bf16.msra.mxu0 0
  %458 = vmatprep.subr.bf16.mxu0 0
  %459 = vmatpush1.bf16.msra.mxu0 0
  %460 = vmatprep.subr.bf16.mxu0 0
  %461 = vmatpush1.bf16.msra.mxu0 0
  %462 = vmatprep.subr.bf16.mxu0 0
  %463 = vmatpush1.bf16.msra.mxu0 0
  %464 = vmatprep.subr.bf16.mxu0 0
  %465 = vmatpush1.bf16.msra.mxu0 0
  %466 = vmatprep.subr.bf16.mxu0 0
  %467 = vmatpush1.bf16.msra.mxu0 0
  %468 = vmatprep.subr.bf16.mxu0 0
  %469 = vmatpush1.bf16.msra.mxu0 0
  %470 = vmatprep.mubr.bf16.mxu0 0
  %471 = vmatmul.mubr.bf16.gmra.mrb[0].mxu0 %v430
  %v472 = vpop.f32.mrb[0].mxu0
  %v473 = vadd.f32 %v377, %v472
  %v474 = vpop.f32.mrb[0].mxu0
  %v475 = vpop.f32.mrb[0].mxu0
  %v476 = vadd.f32 %v382, %v475
  %v477 = vpop.f32.mrb[0].mxu0
  %478 = vmatprep.mubr.bf16.mxu0 0
  %479 = vmatmul.mubr.bf16.gmra.mrb[0].mxu0 %v431
  %v480 = vpop.f32.mrb[0].mxu0
  %v481 = vadd.f32 %v387, %v480
  %v482 = vpop.f32.mrb[0].mxu0
  %v483 = vpop.f32.mrb[0].mxu0
  %v484 = vadd.f32 %v392, %v483
  %v485 = vpop.f32.mrb[0].mxu0
  %486 = vmatprep.mubr.bf16.mxu0 0
  %487 = vmatmul.mubr.bf16.gmra.mrb[0].mxu0 %v432
  %v488 = vpop.f32.mrb[0].mxu0
  %v489 = vadd.f32 %v397, %v488
  %v490 = vpop.f32.mrb[0].mxu0
  %v491 = vpop.f32.mrb[0].mxu0
  %v492 = vadd.f32 %v402, %v491
  %v493 = vpop.f32.mrb[0].mxu0
  %494 = vmatprep.mubr.bf16.mxu0 0
  %495 = vmatmul.mubr.bf16.gmra.mrb[0].mxu0 %v433
  %v496 = vpop.f32.mrb[0].mxu0
  %v497 = vadd.f32 %v407, %v496
  %v498 = vpop.f32.mrb[0].mxu0
  %v499 = vpop.f32.mrb[0].mxu0
  %v500 = vadd.f32 %v412, %v499
  %v501 = vpop.f32.mrb[0].mxu0
  %502 = vdwg.mxu0
  %v503 = vmax.f32 %v473, 0.0
  %v504 = vmax.f32 %v476, 0.0
  %v505 = vmax.f32 %v481, 0.0
  %v506 = vmax.f32 %v484, 0.0
  %v507 = vmax.f32 %v489, 0.0
  %v508 = vmax.f32 %v492, 0.0
  %v509 = vmax.f32 %v497, 0.0
  %v510 = vmax.f32 %v500, 0.0
  %v511 = vpack.c.bf16 %v504, %v503
  %v512 = vpack.c.bf16 %v506, %v505
  %v513 = vpack.c.bf16 %v508, %v507
  %v514 = vpack.c.bf16 %v510, %v509
  %v515 = vld [vmem:[%s5] sm:$0xf]
  %v516 = vld [vmem:[%s5 + $0x4] sm:$0xf]
  %v517 = vld [vmem:[%s5 + $0x8] sm:$0xf]
  %v518 = vld [vmem:[%s5 + $0xc] sm:$0xf]
  %520 = vset.pattern.permute.xlu0 0
  %521 = vperm.xlu0 %520, %v63
  %v522 = vpop.permute.xlu0 %521
  %525 = vset.pattern.permute.xlu0 0
  %526 = vperm.xlu0 %525, %v64
  %v527 = vpop.permute.xlu0 %526
  %530 = vset.pattern.permute.xlu0 0
  %531 = vperm.xlu0 %530, %v65
  %v532 = vpop.permute.xlu0 %531
  %535 = vset.pattern.permute.xlu0 0
  %536 = vperm.xlu0 %535, %v66
  %v537 = vpop.permute.xlu0 %536
  %v543 = vunpack.c.l.b16 %v515
  %v544 = vunpack.c.l.b16 %v516
  %v545 = vunpack.c.l.b16 %v517
  %v546 = vunpack.c.l.b16 %v518
  %v547 = vpack.c.b16 %v544, %v543
  %v548 = vpack.c.b16 %v546, %v545
  %vm549 = vcmask 523264
  %v551 = vsel %vm549, %v547, 0
  %v554 = vsel %vm549, %v548, 0
  %556 = vmatprep.subr.bf16.mxu0 0
  %557 = vmatpush1.bf16.msra.mxu0 %v511
  %558 = vmatprep.subr.bf16.mxu0 0
  %559 = vmatpush1.bf16.msra.mxu0 %v512
  %560 = vmatprep.subr.bf16.mxu0 0
  %561 = vmatpush1.bf16.msra.mxu0 %v513
  %562 = vmatprep.subr.bf16.mxu0 0
  %563 = vmatpush1.bf16.msra.mxu0 %v514
  %564 = vmatprep.subr.bf16.mxu0 0
  %565 = vmatpush1.bf16.msra.mxu0 0
  %566 = vmatprep.subr.bf16.mxu0 0
  %567 = vmatpush1.bf16.msra.mxu0 0
  %568 = vmatprep.subr.bf16.mxu0 0
  %569 = vmatpush1.bf16.msra.mxu0 0
  %570 = vmatprep.subr.bf16.mxu0 0
  %571 = vmatpush1.bf16.msra.mxu0 0
  %572 = vmatprep.subr.bf16.mxu0 0
  %573 = vmatpush1.bf16.msra.mxu0 0
  %574 = vmatprep.subr.bf16.mxu0 0
  %575 = vmatpush1.bf16.msra.mxu0 0
  %576 = vmatprep.subr.bf16.mxu0 0
  %577 = vmatpush1.bf16.msra.mxu0 0
  %578 = vmatprep.subr.bf16.mxu0 0
  %579 = vmatpush1.bf16.msra.mxu0 0
  %580 = vmatprep.subr.bf16.mxu0 0
  %581 = vmatpush1.bf16.msra.mxu0 0
  %582 = vmatprep.subr.bf16.mxu0 0
  %583 = vmatpush1.bf16.msra.mxu0 0
  %584 = vmatprep.subr.bf16.mxu0 0
  %585 = vmatpush1.bf16.msra.mxu0 0
  %586 = vmatprep.subr.bf16.mxu0 0
  %587 = vmatpush1.bf16.msra.mxu0 0
  %588 = vmatprep.mubr.bf16.mxu0 0
  %589 = vmatmul.mubr.bf16.gmra.mrb[0].mxu0 %v551
  %v590 = vpop.f32.mrb[0].mxu0
  %v591 = vadd.f32 %v522, %v590
  %v592 = vpop.f32.mrb[0].mxu0
  %v593 = vpop.f32.mrb[0].mxu0
  %v594 = vadd.f32 %v527, %v593
  %v595 = vpop.f32.mrb[0].mxu0
  %596 = vmatprep.mubr.bf16.mxu0 0
  %597 = vmatmul.mubr.bf16.gmra.mrb[0].mxu0 %v554
  %v598 = vpop.f32.mrb[0].mxu0
  %v599 = vadd.f32 %v532, %v598
  %v600 = vpop.f32.mrb[0].mxu0
  %v601 = vpop.f32.mrb[0].mxu0
  %v602 = vadd.f32 %v537, %v601
  %v603 = vpop.f32.mrb[0].mxu0
  %604 = vdwg.mxu0
  %v605 = vmax.f32 %v591, 0.0
  %v606 = vmax.f32 %v594, 0.0
  %v607 = vmax.f32 %v599, 0.0
  %v608 = vmax.f32 %v602, 0.0
  %v609 = vpack.c.bf16 %v606, %v605
  %v610 = vpack.c.bf16 %v608, %v607
  %v611 = vld [vmem:[%s7] sm:$0xf]
  %v612 = vld [vmem:[%s7 + $0x4] sm:$0xf]
  %614 = vset.pattern.permute.xlu0 0
  %615 = vperm.xlu0 %614, %v67
  %v616 = vpop.permute.xlu0 %615
  %619 = vset.pattern.permute.xlu0 0
  %620 = vperm.xlu0 %619, %v68
  %v621 = vpop.permute.xlu0 %620
  %v625 = vunpack.c.l.b16 %v611
  %v626 = vunpack.c.l.b16 %v612
  %v627 = vpack.c.b16 %v626, %v625
  %vm628 = vcmask 261120
  %v630 = vsel %vm628, %v627, 0
  %632 = vmatprep.subr.bf16.mxu0 0
  %633 = vmatpush1.bf16.msra.mxu0 %v609
  %634 = vmatprep.subr.bf16.mxu0 0
  %635 = vmatpush1.bf16.msra.mxu0 %v610
  %636 = vmatprep.subr.bf16.mxu0 0
  %637 = vmatpush1.bf16.msra.mxu0 0
  %638 = vmatprep.subr.bf16.mxu0 0
  %639 = vmatpush1.bf16.msra.mxu0 0
  %640 = vmatprep.subr.bf16.mxu0 0
  %641 = vmatpush1.bf16.msra.mxu0 0
  %642 = vmatprep.subr.bf16.mxu0 0
  %643 = vmatpush1.bf16.msra.mxu0 0
  %644 = vmatprep.subr.bf16.mxu0 0
  %645 = vmatpush1.bf16.msra.mxu0 0
  %646 = vmatprep.subr.bf16.mxu0 0
  %647 = vmatpush1.bf16.msra.mxu0 0
  %648 = vmatprep.subr.bf16.mxu0 0
  %649 = vmatpush1.bf16.msra.mxu0 0
  %650 = vmatprep.subr.bf16.mxu0 0
  %651 = vmatpush1.bf16.msra.mxu0 0
  %652 = vmatprep.subr.bf16.mxu0 0
  %653 = vmatpush1.bf16.msra.mxu0 0
  %654 = vmatprep.subr.bf16.mxu0 0
  %655 = vmatpush1.bf16.msra.mxu0 0
  %656 = vmatprep.subr.bf16.mxu0 0
  %657 = vmatpush1.bf16.msra.mxu0 0
  %658 = vmatprep.subr.bf16.mxu0 0
  %659 = vmatpush1.bf16.msra.mxu0 0
  %660 = vmatprep.subr.bf16.mxu0 0
  %661 = vmatpush1.bf16.msra.mxu0 0
  %662 = vmatprep.subr.bf16.mxu0 0
  %663 = vmatpush1.bf16.msra.mxu0 0
  %664 = vmatprep.mubr.bf16.mxu0 0
  %665 = vmatmul.mubr.bf16.gmra.mrb[0].mxu0 %v630
  %v666 = vpop.f32.mrb[0].mxu0
  %v667 = vadd.f32 %v616, %v666
  %v668 = vpop.f32.mrb[0].mxu0
  %v669 = vpop.f32.mrb[0].mxu0
  %v670 = vadd.f32 %v621, %v669
  %v671 = vpop.f32.mrb[0].mxu0
  %672 = vdwg.mxu0
  %v673 = vmax.f32 %v667, 0.0
  %v674 = vmax.f32 %v670, 0.0
  %v675 = vpack.c.bf16 %v674, %v673
  %v676 = vld [vmem:[%s9] sm:$0x3]
  %678 = vset.pattern.permute.xlu0 0
  %679 = vperm.xlu0 %678, %v69
  %v680 = vpop.permute.xlu0 %679
  %vm682 = vcmask 130048
  %v684 = vsel %vm682, %v676, 0
  %686 = vmatprep.subr.bf16.mxu0 0
  %687 = vmatpush1.bf16.msra.mxu0 %v675
  %688 = vmatprep.subr.bf16.mxu0 0
  %689 = vmatpush1.bf16.msra.mxu0 0
  %690 = vmatprep.subr.bf16.mxu0 0
  %691 = vmatpush1.bf16.msra.mxu0 0
  %692 = vmatprep.subr.bf16.mxu0 0
  %693 = vmatpush1.bf16.msra.mxu0 0
  %694 = vmatprep.subr.bf16.mxu0 0
  %695 = vmatpush1.bf16.msra.mxu0 0
  %696 = vmatprep.subr.bf16.mxu0 0
  %697 = vmatpush1.bf16.msra.mxu0 0
  %698 = vmatprep.subr.bf16.mxu0 0
  %699 = vmatpush1.bf16.msra.mxu0 0
  %700 = vmatprep.subr.bf16.mxu0 0
  %701 = vmatpush1.bf16.msra.mxu0 0
  %702 = vmatprep.subr.bf16.mxu0 0
  %703 = vmatpush1.bf16.msra.mxu0 0
  %704 = vmatprep.subr.bf16.mxu0 0
  %705 = vmatpush1.bf16.msra.mxu0 0
  %706 = vmatprep.subr.bf16.mxu0 0
  %707 = vmatpush1.bf16.msra.mxu0 0
  %708 = vmatprep.subr.bf16.mxu0 0
  %709 = vmatpush1.bf16.msra.mxu0 0
  %710 = vmatprep.subr.bf16.mxu0 0
  %711 = vmatpush1.bf16.msra.mxu0 0
  %712 = vmatprep.subr.bf16.mxu0 0
  %713 = vmatpush1.bf16.msra.mxu0 0
  %714 = vmatprep.subr.bf16.mxu0 0
  %715 = vmatpush1.bf16.msra.mxu0 0
  %716 = vmatprep.subr.bf16.mxu0 0
  %717 = vmatpush1.bf16.msra.mxu0 0
  %718 = vmatprep.mubr.bf16.mxu0 0
  %719 = vmatmul.mubr.bf16.gmra.mrb[0].mxu0 %v684
  %v720 = vpop.f32.mrb[0].mxu0
  %v721 = vadd.f32 %v680, %v720
  %v722 = vpop.f32.mrb[0].mxu0
  %v723 = vpop.f32.mrb[0].mxu0
  %v724 = vpop.f32.mrb[0].mxu0
  %725 = vdwg.mxu0
  %726 = vst [vmem:[%s11] sm:$0x7] %v721
  // Predicated region
  $region46: #{_forward_impl.1} parent=0 // pred_check
    _
  $region47: #{_forward_impl.1} parent=0 // pred_check_branch
    %728 = sbr.rel (0) target = $region49
  $region48: #{_forward_impl.1} parent=0 // pred_region
    _
  $region49: #{_forward_impl.1} parent=0 // pred_fallthru
    _
  // Predicated region
  $region50: #{_forward_impl.1} parent=0 // pred_check
    _
  $region51: #{_forward_impl.1} parent=0 // pred_check_branch
    %730 = sbr.rel (0) target = $region53
  $region52: #{_forward_impl.1} parent=0 // pred_region
    _
  $region53: #{_forward_impl.1} parent=0 // pred_fallthru
    _

</llo_original>
